<compile_context>
chip_gen: v7x
topology: tpu7x:2x2x1
jax: 0.10.0
libtpu: 0.0.40
codegen_flags: <defaults>
</compile_context>

<pallas_src>
import functools

import jax
import jax.numpy as jnp
from jax.experimental import pallas as pl
from jax.experimental.pallas import tpu as pltpu


def _router_kernel(x_ref, w1_ref, b1_ref, w2_ref, b2_ref, o_ref, acc_ref,
                   *, inv_hw):
    # x_ref : (tile_n, C, hw_tile)   streamed block of the input
    # w1_ref: (C, H1)                fc1 weight (pre-transposed), VMEM-resident
    # b1_ref: (1, H1)
    # w2_ref: (H1, 1)                fc2 weight (pre-transposed)
    # b2_ref: (1, 1)
    # o_ref : (tile_n, 1)
    # acc_ref: (tile_n, C, hw_tile)  f32 running-sum scratch
    k = pl.program_id(1)

    @pl.when(k == 0)
    def _init():
        acc_ref[...] = jnp.zeros_like(acc_ref)

    # Steady state: pure VPU accumulation (no per-tile cross-lane reduce).
    acc_ref[...] += x_ref[...].astype(jnp.float32)

    @pl.when(k == pl.num_programs(1) - 1)
    def _finalize():
        # One XLU lane-reduce + GAP scale, then the (tiny) fc head.
        gap = jnp.sum(acc_ref[...], axis=-1) * inv_hw              # (tile_n, C)
        h = jnp.dot(gap, w1_ref[...],
                    preferred_element_type=jnp.float32) + b1_ref[...]
        h = jnp.maximum(h, 0.0)                                    # ReLU
        # dropout(p=0.0, eval mode) -> identity
        z = jnp.dot(h, w2_ref[...],
                    preferred_element_type=jnp.float32) + b2_ref[...]
        o_ref[...] = jax.nn.sigmoid(z)                             # soft_decision


def router_gap_two_fc(x_nchw, w1, b1, w2, b2, *, hw_tile=None):
    """x_nchw: (N, C, H, W) (f32 or bf16). w1: (H1, C), b1: (H1,),
    w2: (1, H1), b2: (1,). Returns sigmoid routing probs, shape (N,)."""
    N, C, H, W = x_nchw.shape
    HW = H * W
    H1 = w1.shape[0]
    x = x_nchw.reshape(N, C, HW)          # keep input dtype on the wire (bf16 OK)
    bytes_per = jnp.dtype(x.dtype).itemsize

    # Batch tiling: full N when small, otherwise 8-row (sublane-aligned) tiles.
    tile_n = N if N <= 8 else 8
    n_pad = ((N + tile_n - 1) // tile_n) * tile_n

    # HW tiling: multiple of 128 lanes; cap each x buffer at ~2 MiB so
    # 2 pipeline buffers + the f32 accumulator + weights stay well under the
    # scoped-VMEM default on every generation (16 MiB v5e, 32 MiB v6e/v7x).
    if hw_tile is None:
        max_block_bytes = 2 << 20
        lanes_cap = max(
            128, (max_block_bytes // (tile_n * C * bytes_per)) // 128 * 128)
        hw_tile = min(lanes_cap, ((HW + 127) // 128) * 128)
    hw_pad = ((HW + hw_tile - 1) // hw_tile) * hw_tile

    if (n_pad != N) or (hw_pad != HW):
        # Zero padding: extra HW lanes add 0 to the sum; extra rows are sliced off.
        x = jnp.pad(x, ((0, n_pad - N), (0, 0), (0, hw_pad - HW)))

    w1t = jnp.transpose(w1).astype(jnp.float32)     # (C, H1)
    b1r = b1.reshape(1, H1).astype(jnp.float32)
    w2t = jnp.transpose(w2).astype(jnp.float32)     # (H1, 1)
    b2r = b2.reshape(1, 1).astype(jnp.float32)

    grid = (n_pad // tile_n, hw_pad // hw_tile)

    # Advisory: this call is HBM-bandwidth dominated (reads all of x once).
    cost = pl.CostEstimate(
        flops=2 * N * C * HW + 2 * N * C * H1 + 2 * N * H1,
        transcendentals=N,
        bytes_accessed=N * C * HW * bytes_per
        + 4 * (w1.size + b1.size + w2.size + b2.size) + 4 * N,
    )

    kernel = functools.partial(_router_kernel, inv_hw=float(1.0 / HW))

    out = pl.pallas_call(
        kernel,
        out_shape=jax.ShapeDtypeStruct((n_pad, 1), jnp.float32),
        grid_spec=pltpu.PrefetchScalarGridSpec(
            num_scalar_prefetch=0,
            grid=grid,
            in_specs=[
                # Streamed input: batch tile i, HW (reduction) tile k.
                pl.BlockSpec((tile_n, C, hw_tile), lambda i, k: (i, 0, k)),
                # Tiny weights/biases: constant index_map -> DMA'd once, resident.
                pl.BlockSpec((C, H1), lambda i, k: (0, 0)),
                pl.BlockSpec((1, H1), lambda i, k: (0, 0)),
                pl.BlockSpec((H1, 1), lambda i, k: (0, 0)),
                pl.BlockSpec((1, 1), lambda i, k: (0, 0)),
            ],
            out_specs=pl.BlockSpec((tile_n, 1), lambda i, k: (i, 0)),
            scratch_shapes=[pltpu.VMEM((tile_n, C, hw_tile), jnp.float32)],
        ),
        compiler_params=pltpu.CompilerParams(
            dimension_semantics=("parallel", "arbitrary")),
        cost_estimate=cost,
    )(x, w1t, b1r, w2t, b2r)

    return out[:N, 0]                                  # final .squeeze()


def _reference(x_nchw, w1, b1, w2, b2):
    gap = jnp.mean(x_nchw.astype(jnp.float32), axis=(-1, -2))   # (N, C)
    h = jnp.maximum(gap @ w1.T + b1, 0.0)
    z = h @ w2.T + b2
    return jax.nn.sigmoid(z).reshape(-1)


if __name__ == "__main__":
    # Module config: input_nc=4, reduction_rate=2 -> hidden = 4//2 + 1 = 3
    N, C, H, W = 2, 4, 16, 16
    HIDDEN = C // 2 + 1

    key = jax.random.PRNGKey(0)
    kx, k1, k2, k3, k4 = jax.random.split(key, 5)

    x = jax.random.normal(kx, (N, C, H, W), dtype=jnp.float32)
    # nn.Linear layout: weight (out, in), bias (out,)
    w1 = jax.random.normal(k1, (HIDDEN, C), dtype=jnp.float32) * 0.1
    b1 = jax.random.normal(k2, (HIDDEN,), dtype=jnp.float32) * 0.1
    w2 = jax.random.normal(k3, (1, HIDDEN), dtype=jnp.float32) * 0.1
    b2 = jax.random.normal(k4, (1,), dtype=jnp.float32) * 0.1

    ref = _reference(x, w1, b1, w2, b2)

    # Force 2 HW tiles (128 lanes each) so the init/accumulate/finalize
    # pipeline path is exercised, then also check the auto-tiled path.
    out_tiled = jax.block_until_ready(
        router_gap_two_fc(x, w1, b1, w2, b2, hw_tile=128))
    out_auto = jax.block_until_ready(router_gap_two_fc(x, w1, b1, w2, b2))

    assert out_tiled.shape == (N,), out_tiled.shape
    assert jnp.allclose(out_tiled, ref, atol=1e-5, rtol=1e-5), (out_tiled, ref)
    assert jnp.allclose(out_auto, ref, atol=1e-5, rtol=1e-5), (out_auto, ref)
    print("KERNEL_OK")
</pallas_src>

<mosaic_0001>
module attributes {stable_mosaic.version = 11 : i64} {
  func.func @_router_kernel(%arg0: i32, %arg1: i32, %arg2: memref<2x4x128xf32, #tpu.memory_space<vmem>>, %arg3: memref<4x3xf32, #tpu.memory_space<vmem>>, %arg4: memref<1x3xf32, #tpu.memory_space<vmem>>, %arg5: memref<3x1xf32, #tpu.memory_space<vmem>>, %arg6: memref<1x1xf32, #tpu.memory_space<vmem>>, %arg7: memref<2x1xf32, #tpu.memory_space<vmem>>, %arg8: memref<2x4x128xf32, #tpu.memory_space<vmem>>) attributes {dimension_semantics = [#tpu.dimension_semantics<parallel>, #tpu.dimension_semantics<arbitrary>], iteration_bounds = array<i64: 1, 2>, scalar_prefetch = 0 : i64, scratch_operands = 1 : i64, tpu.core_type = #tpu.core_type<tc>, window_params = [{transform_indices = @transform_0, window_bounds = array<i64: 2, 4, 128>}, {pipeline_mode = #tpu.pipeline_mode<synchronous>, transform_indices = @transform_1, window_bounds = array<i64: 4, 3>}, {pipeline_mode = #tpu.pipeline_mode<synchronous>, transform_indices = @transform_2, window_bounds = array<i64: 1, 3>}, {pipeline_mode = #tpu.pipeline_mode<synchronous>, transform_indices = @transform_3, window_bounds = array<i64: 3, 1>}, {pipeline_mode = #tpu.pipeline_mode<synchronous>, transform_indices = @transform_4, window_bounds = array<i64: 1, 1>}, {transform_indices = @transform_5, window_bounds = array<i64: 2, 1>}]} {
    %c0_i32 = arith.constant 0 : i32
    %0 = arith.cmpi eq, %arg1, %c0_i32 : i32
    %1 = arith.extui %0 : i1 to i32
    %c0_i32_0 = arith.constant 0 : i32
    %2 = arith.cmpi ne, %1, %c0_i32_0 : i32
    scf.if %2 {
      %cst = arith.constant 0.000000e+00 : f32
      %10 = vector.broadcast %cst : f32 to vector<2x4x128xf32>
      %c0_10 = arith.constant 0 : index
      %c0_11 = arith.constant 0 : index
      %c0_12 = arith.constant 0 : index
      %11 = vector.load %arg8[%c0_10, %c0_11, %c0_12] : memref<2x4x128xf32, #tpu.memory_space<vmem>>, vector<2x4x128xf32>
      tpu.vector_store %arg8[%c0_10, %c0_11, %c0_12], %10 {strides = array<i32>} : memref<2x4x128xf32, #tpu.memory_space<vmem>>, vector<2x4x128xf32>,
    } else {
    }
    %c0 = arith.constant 0 : index
    %c0_1 = arith.constant 0 : index
    %c0_2 = arith.constant 0 : index
    %3 = vector.load %arg8[%c0, %c0_1, %c0_2] : memref<2x4x128xf32, #tpu.memory_space<vmem>>, vector<2x4x128xf32>
    %c0_3 = arith.constant 0 : index
    %c0_4 = arith.constant 0 : index
    %c0_5 = arith.constant 0 : index
    %4 = vector.load %arg2[%c0_3, %c0_4, %c0_5] : memref<2x4x128xf32, #tpu.memory_space<vmem>>, vector<2x4x128xf32>
    %5 = arith.addf %3, %4 : vector<2x4x128xf32>
    %c0_6 = arith.constant 0 : index
    %c0_7 = arith.constant 0 : index
    %c0_8 = arith.constant 0 : index
    %6 = vector.load %arg8[%c0_6, %c0_7, %c0_8] : memref<2x4x128xf32, #tpu.memory_space<vmem>>, vector<2x4x128xf32>
    tpu.vector_store %arg8[%c0_6, %c0_7, %c0_8], %5 {strides = array<i32>} : memref<2x4x128xf32, #tpu.memory_space<vmem>>, vector<2x4x128xf32>,
    %c1_i32 = arith.constant 1 : i32
    %7 = arith.cmpi eq, %arg1, %c1_i32 : i32
    %8 = arith.extui %7 : i1 to i32
    %c0_i32_9 = arith.constant 0 : i32
    %9 = arith.cmpi ne, %8, %c0_i32_9 : i32
    scf.if %9 {
      %c0_10 = arith.constant 0 : index
      %c0_11 = arith.constant 0 : index
      %c0_12 = arith.constant 0 : index
      %10 = vector.load %arg8[%c0_10, %c0_11, %c0_12] : memref<2x4x128xf32, #tpu.memory_space<vmem>>, vector<2x4x128xf32>
      %cst = arith.constant dense<0.000000e+00> : vector<2x4xf32>
      %11 = vector.multi_reduction <add>, %10, %cst [2] : vector<2x4x128xf32> to vector<2x4xf32>
      %cst_13 = arith.constant 3.906250e-03 : f32
      %12 = vector.broadcast %cst_13 : f32 to vector<2x4xf32>
      %13 = arith.mulf %11, %12 : vector<2x4xf32>
      %c0_14 = arith.constant 0 : index
      %c0_15 = arith.constant 0 : index
      %14 = vector.load %arg3[%c0_14, %c0_15] : memref<4x3xf32, #tpu.memory_space<vmem>>, vector<4x3xf32>
      %cst_16 = arith.constant dense<0.000000e+00> : vector<2x3xf32>
      %15 = tpu.matmul %13, %14, %cst_16 {dimension_numbers = #tpu.dot_dimension_numbers<[1], [0], [0], [1], [0, 0, 1, 1], [], []>} : vector<2x4xf32>, vector<4x3xf32>, vector<2x3xf32> -> vector<2x3xf32>
      %c0_17 = arith.constant 0 : index
      %c0_18 = arith.constant 0 : index
      %16 = vector.load %arg4[%c0_17, %c0_18] : memref<1x3xf32, #tpu.memory_space<vmem>>, vector<1x3xf32>
      %17 = vector.broadcast %16 : vector<1x3xf32> to vector<2x3xf32>
      %18 = arith.addf %15, %17 : vector<2x3xf32>
      %cst_19 = arith.constant 0.000000e+00 : f32
      %19 = vector.broadcast %cst_19 : f32 to vector<2x3xf32>
      %20 = arith.maximumf %18, %19 : vector<2x3xf32>
      %c0_20 = arith.constant 0 : index
      %c0_21 = arith.constant 0 : index
      %21 = vector.load %arg5[%c0_20, %c0_21] : memref<3x1xf32, #tpu.memory_space<vmem>>, vector<3x1xf32>
      %cst_22 = arith.constant dense<0.000000e+00> : vector<2x1xf32>
      %22 = tpu.matmul %20, %21, %cst_22 {dimension_numbers = #tpu.dot_dimension_numbers<[1], [0], [0], [1], [0, 0, 1, 1], [], []>} : vector<2x3xf32>, vector<3x1xf32>, vector<2x1xf32> -> vector<2x1xf32>
      %c0_23 = arith.constant 0 : index
      %c0_24 = arith.constant 0 : index
      %23 = vector.load %arg6[%c0_23, %c0_24] : memref<1x1xf32, #tpu.memory_space<vmem>>, vector<1x1xf32>
      %24 = vector.broadcast %23 : vector<1x1xf32> to vector<2x1xf32>
      %25 = arith.addf %22, %24 : vector<2x1xf32>
      %26 = arith.negf %25 : vector<2x1xf32>
      %27 = math.exp %26 : vector<2x1xf32>
      %cst_25 = arith.constant 1.000000e+00 : f32
      %28 = vector.broadcast %cst_25 : f32 to vector<2x1xf32>
      %29 = arith.addf %28, %27 : vector<2x1xf32>
      %30 = arith.divf %28, %29 : vector<2x1xf32>
      %c0_26 = arith.constant 0 : index
      %c0_27 = arith.constant 0 : index
      %31 = vector.load %arg7[%c0_26, %c0_27] : memref<2x1xf32, #tpu.memory_space<vmem>>, vector<2x1xf32>
      tpu.vector_store %arg7[%c0_26, %c0_27], %30 {strides = array<i32>} : memref<2x1xf32, #tpu.memory_space<vmem>>, vector<2x1xf32>,
    } else {
    }
    return
  }
  func.func @transform_0(%arg0: i32, %arg1: i32) -> (i32, i32, i32) {
    %c0_i32 = arith.constant 0 : i32
    %c0_i32_0 = arith.constant 0 : i32
    return %arg0, %c0_i32, %arg1 : i32, i32, i32
  }
  func.func @transform_1(%arg0: i32, %arg1: i32) -> (i32, i32) {
    %c0_i32 = arith.constant 0 : i32
    %c0_i32_0 = arith.constant 0 : i32
    %c0_i32_1 = arith.constant 0 : i32
    return %c0_i32, %c0_i32_0 : i32, i32
  }
  func.func @transform_2(%arg0: i32, %arg1: i32) -> (i32, i32) {
    %c0_i32 = arith.constant 0 : i32
    %c0_i32_0 = arith.constant 0 : i32
    %c0_i32_1 = arith.constant 0 : i32
    return %c0_i32, %c0_i32_0 : i32, i32
  }
  func.func @transform_3(%arg0: i32, %arg1: i32) -> (i32, i32) {
    %c0_i32 = arith.constant 0 : i32
    %c0_i32_0 = arith.constant 0 : i32
    %c0_i32_1 = arith.constant 0 : i32
    return %c0_i32, %c0_i32_0 : i32, i32
  }
  func.func @transform_4(%arg0: i32, %arg1: i32) -> (i32, i32) {
    %c0_i32 = arith.constant 0 : i32
    %c0_i32_0 = arith.constant 0 : i32
    %c0_i32_1 = arith.constant 0 : i32
    return %c0_i32, %c0_i32_0 : i32, i32
  }
  func.func @transform_5(%arg0: i32, %arg1: i32) -> (i32, i32) {
    %c0_i32 = arith.constant 0 : i32
    %c0_i32_0 = arith.constant 0 : i32
    return %arg0, %c0_i32 : i32, i32
  }
}

</mosaic_0001>

<llo_original>
// kernel: tpu_custom_call.1
$region0: #{tpu_custom_call.1}
  #allocation0 [shape = 'u32[]', space=smem, size = 0x4, offset = 0x4, fixed_abs, tag = 'smem constant byte address 0x4 - core index']
  #allocation1 [shape = 'u32[144,128]{1,0:T(1,128)}', space=vmem, size = 0x12000, scoped, tag = 'internal scratch']
  #allocation2 [shape = 'f32[2,4,128]{2,1,0:T(4,128)}', space=vmem, size = 0x1000, scoped, tag = 'scratch operand']
  #allocation3 [shape = 'f32[1,1]{1,0:T(1,128)S(1)}', space=vmem, size = 0x200, scoped, tag = 'scoped memory for tpu_custom_call.1']
  %s0 = inlined_call_operand.hbm [shape: f32[2,4,256], index: 0, kind: input, shape index: {}]
  %s1 = inlined_call_operand.vmem [shape: f32[4,3], index: 1, kind: input, shape index: {}]
  %s2 = inlined_call_operand.vmem [shape: f32[1,3], index: 2, kind: input, shape index: {}]
  %s3 = inlined_call_operand.vmem [shape: f32[3,1], index: 3, kind: input, shape index: {}]
  %s4 = inlined_call_operand.<no memory space> [shape: f32[1,1], index: 4, kind: input, shape index: {}]
  %s5 = inlined_call_operand.vmem [shape: f32[2,1], index: 5, kind: output, shape index: {}]
  %s6 = sld [smem:[#allocation0]]
  $region65: #{tpu_custom_call.1} parent=0
    _
  %s8 = ssub.s32 1, %s6
  %s9 = scalar_select 0, %s8, %s6
  %v10 = vstv %s4
  %11 = vst [vmem:[#allocation3] sm:$0x1] %v10
  $region1: #{tpu_custom_call.1} parent=0
    #allocation4 [shape = 'u8[8192]{0}', space=vmem, size = 0x2000, scoped, tag = 'input window, operand 0']
    #allocation5 [shape = 's32[2]{0}', space=sflag, size = 0x8, scoped, tag = 'scoped memory for tpu_custom_call.1']
    %12 = vsyncpa [#allocation5], 0
    %s13 = scalar_lea.sflag [#allocation5], 1
    %14 = vsyncpa %s13, 0
    loop: start=0, step=1, limit=4
    $region2: #{tpu_custom_call.1} parent=1 // loop_pre_header
      _
    $region3: #{tpu_custom_call.1} parent=1 // loop_header
      %s16 = sphi 0, %s20
      %p17 = scmp.ge.s32.totalorder %s16, 4
      %s23 = sphi 0, %s35
      %s24 = sphi 0, %s31
      %s25 = sphi 0, %s23
      %s26 = sphi 0, %s24
      %s27 = sphi 0, %s25
      %s28 = sphi 0, %s26
      %s40 = sphi 0, %s42
      %s43 = sphi 0, %s40
      %s44 = sphi 0, %s43
      %s60 = sphi 0, %s44
      %s64 = sphi 0, %s64
      %s66 = sphi 0, %s64
      %s67 = sphi 0, %s66
      %s81 = sphi 0, %s67
      %s85 = sphi 0, %s85
      %s87 = sphi 0, %s85
      %s88 = sphi 0, %s87
      %s102 = sphi 0, %s88
      %s106 = sphi 0, %s106
      %s108 = sphi 0, %s106
      %s109 = sphi 0, %s108
      %s123 = sphi 0, %s109
      %s127 = sphi 0, %s127
      %s129 = sphi 0, %s127
      %s130 = sphi 0, %s129
      %s144 = sphi 0, %s130
      %s150 = sphi 0, %s152
      %s153 = sphi 0, %s150
      %s154 = sphi 0, %s153
      %s170 = sphi 0, %s154
    $region4: #{tpu_custom_call.1} parent=1 // loop_header_branch
      %19 = sbr.rel (%p17) target = $region8
    $region5: #{tpu_custom_call.1} parent=1 // loop_body
      %s21 = ssub.s32 %s16, 1
      %s22 = ssub.s32 %s16, 2
      %s29 = sadd.s32 1, %s24
      %p30 = scmp.ge.s32.totalorder %s29, 2
      %s31 = scalar_select %p30, 0, %s29
      %s32 = sadd.s32 1, %s23
      %s33 = scalar_select %p30, %s32, %s23
      %p34 = scmp.ge.s32.totalorder %s33, 1
      %s35 = scalar_select %p34, 0, %s33
      %s36 = ssub.s32 %s23, %s35
      %s37 = ssub.s32 %s24, %s31
      %s38 = sor.u32 %s36, %s37
      %p39 = scmp.eq.s32.totalorder %s38, 0
      %s41 = sadd.s32 %s40, 1
      %s42 = scalar_select %p39, %s40, %s41
      %p45 = pneg %p39
      %p46 = scmp.eq.s32.totalorder %s16, 1
      %p47 = por %p45, %p46
      %p48 = scmp.ne.s32.totalorder %s40, %s43
      %p49 = scmp.eq.s32.totalorder %s16, 0
      %p50 = por %p48, %p49
      %p51 = scmp.ne.s32.totalorder %s40, %s43
      %p52 = scmp.eq.s32.totalorder %s21, 1
      %p53 = por %p51, %p52
      %p54 = scmp.ne.s32.totalorder %s43, %s44
      %p55 = scmp.eq.s32.totalorder %s21, 0
      %p56 = por %p54, %p55
      %p57 = scmp.ne.s32.totalorder %s43, %s44
      %p58 = scmp.eq.s32.totalorder %s22, 1
      %p59 = por %p57, %p58
      %p61 = scmp.ne.s32.totalorder %s44, %s60
      %p62 = scmp.eq.s32.totalorder %s22, 0
      %p63 = por %p61, %p62
      %s65 = sadd.s32 %s64, 1
      %p68 = scmp.eq.s32.totalorder %s16, 1
      %p69 = scmp.ne.s32.totalorder %s64, %s66
      %p70 = scmp.eq.s32.totalorder %s16, 0
      %p71 = por %p69, %p70
      %p72 = scmp.ne.s32.totalorder %s64, %s66
      %p73 = scmp.eq.s32.totalorder %s21, 1
      %p74 = por %p72, %p73
      %p75 = scmp.ne.s32.totalorder %s66, %s67
      %p76 = scmp.eq.s32.totalorder %s21, 0
      %p77 = por %p75, %p76
      %p78 = scmp.ne.s32.totalorder %s66, %s67
      %p79 = scmp.eq.s32.totalorder %s22, 1
      %p80 = por %p78, %p79
      %p82 = scmp.ne.s32.totalorder %s67, %s81
      %p83 = scmp.eq.s32.totalorder %s22, 0
      %p84 = por %p82, %p83
      %s86 = sadd.s32 %s85, 1
      %p89 = scmp.eq.s32.totalorder %s16, 1
      %p90 = scmp.ne.s32.totalorder %s85, %s87
      %p91 = scmp.eq.s32.totalorder %s16, 0
      %p92 = por %p90, %p91
      %p93 = scmp.ne.s32.totalorder %s85, %s87
      %p94 = scmp.eq.s32.totalorder %s21, 1
      %p95 = por %p93, %p94
      %p96 = scmp.ne.s32.totalorder %s87, %s88
      %p97 = scmp.eq.s32.totalorder %s21, 0
      %p98 = por %p96, %p97
      %p99 = scmp.ne.s32.totalorder %s87, %s88
      %p100 = scmp.eq.s32.totalorder %s22, 1
      %p101 = por %p99, %p100
      %p103 = scmp.ne.s32.totalorder %s88, %s102
      %p104 = scmp.eq.s32.totalorder %s22, 0
      %p105 = por %p103, %p104
      %s107 = sadd.s32 %s106, 1
      %p110 = scmp.eq.s32.totalorder %s16, 1
      %p111 = scmp.ne.s32.totalorder %s106, %s108
      %p112 = scmp.eq.s32.totalorder %s16, 0
      %p113 = por %p111, %p112
      %p114 = scmp.ne.s32.totalorder %s106, %s108
      %p115 = scmp.eq.s32.totalorder %s21, 1
      %p116 = por %p114, %p115
      %p117 = scmp.ne.s32.totalorder %s108, %s109
      %p118 = scmp.eq.s32.totalorder %s21, 0
      %p119 = por %p117, %p118
      %p120 = scmp.ne.s32.totalorder %s108, %s109
      %p121 = scmp.eq.s32.totalorder %s22, 1
      %p122 = por %p120, %p121
      %p124 = scmp.ne.s32.totalorder %s109, %s123
      %p125 = scmp.eq.s32.totalorder %s22, 0
      %p126 = por %p124, %p125
      %s128 = sadd.s32 %s127, 1
      %p131 = scmp.eq.s32.totalorder %s16, 1
      %p132 = scmp.ne.s32.totalorder %s127, %s129
      %p133 = scmp.eq.s32.totalorder %s16, 0
      %p134 = por %p132, %p133
      %p135 = scmp.ne.s32.totalorder %s127, %s129
      %p136 = scmp.eq.s32.totalorder %s21, 1
      %p137 = por %p135, %p136
      %p138 = scmp.ne.s32.totalorder %s129, %s130
      %p139 = scmp.eq.s32.totalorder %s21, 0
      %p140 = por %p138, %p139
      %p141 = scmp.ne.s32.totalorder %s129, %s130
      %p142 = scmp.eq.s32.totalorder %s22, 1
      %p143 = por %p141, %p142
      %p145 = scmp.ne.s32.totalorder %s130, %s144
      %p146 = scmp.eq.s32.totalorder %s22, 0
      %p147 = por %p145, %p146
      %s148 = ssub.s32 %s23, %s35
      %p149 = scmp.eq.s32.totalorder %s148, 0
      %s151 = sadd.s32 %s150, 1
      %s152 = scalar_select %p149, %s150, %s151
      %p155 = pneg %p149
      %p156 = scmp.eq.s32.totalorder %s16, 1
      %p157 = por %p155, %p156
      %p158 = scmp.ne.s32.totalorder %s150, %s153
      %p159 = scmp.eq.s32.totalorder %s16, 0
      %p160 = por %p158, %p159
      %p161 = scmp.ne.s32.totalorder %s150, %s153
      %p162 = scmp.eq.s32.totalorder %s21, 1
      %p163 = por %p161, %p162
      %p164 = scmp.ne.s32.totalorder %s153, %s154
      %p165 = scmp.eq.s32.totalorder %s21, 0
      %p166 = por %p164, %p165
      %p167 = scmp.ne.s32.totalorder %s153, %s154
      %p168 = scmp.eq.s32.totalorder %s22, 1
      %p169 = por %p167, %p168
      %p171 = scmp.ne.s32.totalorder %s154, %s170
      %p172 = scmp.eq.s32.totalorder %s22, 0
      %p173 = por %p171, %p172
      %p174 = scmp.le.s32.totalorder 1, %s16
      %p175 = scmp.lt.s32.totalorder %s16, 3
      %p176 = pnand %p174, %p175
      %p177 = pneg %p176
      // Predicated region
      $region9: #{tpu_custom_call.1} parent=5 // pred_check
        _
      $region10: #{tpu_custom_call.1} parent=5 // pred_check_branch
        %179 = sbr.rel (%p176) target = $region12
      $region11: #{tpu_custom_call.1} parent=5 // pred_region
        %s180 = ssub.s32 %s16, 1
        // Predicated region
        $region13: #{tpu_custom_call.1} parent=11 // pred_check
          %p181 = pneg %p77
        $region14: #{tpu_custom_call.1} parent=11 // pred_check_branch
          %183 = sbr.rel (%p181) target = $region16
        $region15: #{tpu_custom_call.1} parent=11 // pred_region
          _
        $region16: #{tpu_custom_call.1} parent=11 // pred_fallthru
          _
        // Predicated region
        $region17: #{tpu_custom_call.1} parent=11 // pred_check
          %p184 = pneg %p98
        $region18: #{tpu_custom_call.1} parent=11 // pred_check_branch
          %186 = sbr.rel (%p184) target = $region20
        $region19: #{tpu_custom_call.1} parent=11 // pred_region
          _
        $region20: #{tpu_custom_call.1} parent=11 // pred_fallthru
          _
        // Predicated region
        $region21: #{tpu_custom_call.1} parent=11 // pred_check
          %p187 = pneg %p119
        $region22: #{tpu_custom_call.1} parent=11 // pred_check_branch
          %189 = sbr.rel (%p187) target = $region24
        $region23: #{tpu_custom_call.1} parent=11 // pred_region
          _
        $region24: #{tpu_custom_call.1} parent=11 // pred_fallthru
          _
        // Predicated region
        $region25: #{tpu_custom_call.1} parent=11 // pred_check
          %p190 = pneg %p140
        $region26: #{tpu_custom_call.1} parent=11 // pred_check_branch
          %192 = sbr.rel (%p190) target = $region28
        $region27: #{tpu_custom_call.1} parent=11 // pred_region
          _
        $region28: #{tpu_custom_call.1} parent=11 // pred_fallthru
          _
      $region12: #{tpu_custom_call.1} parent=5 // pred_fallthru
        _
      %p193 = scmp.lt.s32.totalorder %s16, 2
      // Predicated region
      $region29: #{tpu_custom_call.1} parent=5 // pred_check
        %p194 = pneg %p193
      $region30: #{tpu_custom_call.1} parent=5 // pred_check_branch
        %196 = sbr.rel (%p194) target = $region32
      $region31: #{tpu_custom_call.1} parent=5 // pred_region
        // Predicated region
        $region33: #{tpu_custom_call.1} parent=31 // pred_check
          %p197 = pneg %p50
        $region34: #{tpu_custom_call.1} parent=31 // pred_check_branch
          %199 = sbr.rel (%p197) target = $region36
        $region35: #{tpu_custom_call.1} parent=31 // pred_region
          %s200 = sand.u32 %s40, 1
          %s201 = scalar_lea.sflag [#allocation5], %s200
          %s202 = sand.u32 %s40, 1
          %s203 = smul.addr %s202, 8
          %s204 = scalar_lea.vmem [#allocation4], %s203
          %s205 = smul.u32 2, %s23
          %s207 = ssub.s32 128, 128
          %208 = vsyncadd %s201, %s207
          %s209 = smul.addr %s205, 2
          %s210 = sadd.s32 %s24, %s209
          %s211 = smul.addr %s210, 64
          %s212 = scalar_lea.hbm %s0, %s211
          %s213 = sshll.u32 %s204, 4
          %s214 = int_to_ptr.vmem [resolvable:$true] %s213
          %219 = dma.hbm_to_vmem [thread:$0]  %s212, 128, %s214, %s201, 128, 64, 4
        $region36: #{tpu_custom_call.1} parent=31 // pred_fallthru
          _
      $region32: #{tpu_custom_call.1} parent=5 // pred_fallthru
        _
      %p220 = scmp.le.s32.totalorder 1, %s16
      %p221 = scmp.lt.s32.totalorder %s16, 3
      %p222 = pnand %p220, %p221
      %p223 = pneg %p222
      // Predicated region
      $region37: #{tpu_custom_call.1} parent=5 // pred_check
        _
      $region38: #{tpu_custom_call.1} parent=5 // pred_check_branch
        %225 = sbr.rel (%p222) target = $region40
      $region39: #{tpu_custom_call.1} parent=5 // pred_region
        %s226 = ssub.s32 %s16, 1
        %s227 = sand.u32 %s43, 1
        %s228 = scalar_lea.sflag [#allocation5], %s227
        %s229 = sand.u32 %s43, 1
        %s230 = smul.addr %s229, 8
        %s231 = scalar_lea.vmem [#allocation4], %s230
        // Predicated region
        $region41: #{tpu_custom_call.1} parent=39 // pred_check
          %p232 = pneg %p56
        $region42: #{tpu_custom_call.1} parent=39 // pred_check_branch
          %234 = sbr.rel (%p232) target = $region44
        $region43: #{tpu_custom_call.1} parent=39 // pred_region
          %235 = dma.done %s228, 128
        $region44: #{tpu_custom_call.1} parent=39 // pred_fallthru
          _
        %s236 = sand.u32 %s43, 1
        %s237 = scalar_lea.sflag [#allocation5], %s236
        %s238 = sand.u32 %s43, 1
        %s239 = smul.addr %s238, 8
        %s240 = scalar_lea.vmem [#allocation4], %s239
        %p241 = pneg %p56
        %p242 = pneg %p53
        %p243 = pneg %p77
        %p244 = pneg %p74
        %p245 = pneg %p98
        %p246 = pneg %p95
        %p247 = pneg %p119
        %p248 = pneg %p116
        %p249 = pneg %p140
        %p250 = pneg %p137
        %p251 = pneg %p166
        %p252 = pneg %p163
        %p253 = scmp.lt.s32.totalorder %s25, 0
        %s254 = scalar_select %p253, %s25, 0
        %s255 = smul.addr %s254, 2
        %s256 = scalar_lea.vmem %s5, %s255
        %s257 = smul.u32 2, %s25
        %p258 = scmp.lt.s32.totalorder %s25, 0
        %s259 = scalar_select %p258, %s25, 0
        %s260 = smul.addr %s259, 2
        %s261 = scalar_lea.vmem %s5, %s260
        %p262 = scmp.eq.s32.totalorder %s26, 0
        // Predicated region
        $region45: #{tpu_custom_call.1} parent=39 // pred_check
          %p263 = pneg %p262
        $region46: #{tpu_custom_call.1} parent=39 // pred_check_branch
          %265 = sbr.rel (%p263) target = $region48
        $region47: #{tpu_custom_call.1} parent=39 // pred_region
          %266 = vst [vmem:[#allocation2] sm:$0xf] 0.0
          %267 = vst [vmem:[#allocation2 + $0x4] sm:$0xf] 0.0
        $region48: #{tpu_custom_call.1} parent=39 // pred_fallthru
          _
        %v268 = vld [vmem:[#allocation2] sm:$0xf]
        %v269 = vld [vmem:[#allocation2 + $0x4] sm:$0xf]
        %v270 = vld [vmem:[%s231] sm:$0xf]
        %v271 = vld [vmem:[%s231 + $0x4] sm:$0xf]
        %v272 = vadd.f32 %v268, %v270
        %v273 = vadd.f32 %v269, %v271
        %274 = vst [vmem:[#allocation2] sm:$0xf] %v272
        %275 = vst [vmem:[#allocation2 + $0x4] sm:$0xf] %v273
        %p276 = scmp.eq.s32.totalorder %s26, 1
        // Predicated region
        $region49: #{tpu_custom_call.1} parent=39 // pred_check
          %p277 = pneg %p276
        $region50: #{tpu_custom_call.1} parent=39 // pred_check_branch
          %279 = sbr.rel (%p277) target = $region52
        $region51: #{tpu_custom_call.1} parent=39 // pred_region
          %v280 = vld [vmem:[#allocation2] sm:$0xf]
          %v281 = vld [vmem:[#allocation2 + $0x4] sm:$0xf]
          %vm282 = vcmask 1043456
          %v283 = vsel %vm282, %v280, 0.0
          %284 = vadd.xlane.f32.xlu0 %v283
          %v285 = vpop.xlane.xlu0 %284
          %v286 = vsel %vm282, %v281, 0.0
          %287 = vadd.xlane.f32.xlu0 %v286
          %v288 = vpop.xlane.xlu0 %287
          %v289 = vmul.f32 %v285, 0.00390625
          %v290 = vmul.f32 %v288, 0.00390625
          %v291 = vld [vmem:[%s1] sm:$0xf]
          %v292 = vld [vmem:[%s2] sm:$0x1]
          %v294 = vlaneseq
          %v295 = vshrl.u32 %v294, 7
          %v296 = vsub.s32 0, %v295
          %v297 = vrot.slane %v292, %v296
          %v301 = vlaneseq
          %v302 = vand.u32 %v301, 127
          %v303 = vlaneseq
          %v304 = vshrl.u32 %v303, 7
          %v305 = vsub.s32 %v302, %v304
          %v306 = vrot.slane %v289, %v305
          %v307 = vlaneseq
          %v308 = vshrl.u32 %v307, 7
          %v309 = vsub.s32 %v302, %v308
          %v310 = vrot.slane %v290, %v309
          %vm311 = vcmask 1041409
          %v312 = vsel %vm311, %v310, %v306
          %vm313 = vcmask 31744
          %v314 = vsel %vm313, %v312, 0
          %v317 = vsel %vm282, %v291, 0
          %319 = vmatprep.subr.mxu0 0.0
          %320 = vmatpush1.msra.mxu0 %v317
          %321 = vmatprep.subr.mxu0 0.0
          %322 = vmatpush1.msra.mxu0 0.0
          %323 = vmatprep.subr.mxu0 0.0
          %324 = vmatpush1.msra.mxu0 0.0
          %325 = vmatprep.subr.mxu0 0.0
          %326 = vmatpush1.msra.mxu0 0.0
          %327 = vmatprep.subr.mxu0 0.0
          %328 = vmatpush1.msra.mxu0 0.0
          %329 = vmatprep.subr.mxu0 0.0
          %330 = vmatpush1.msra.mxu0 0.0
          %331 = vmatprep.subr.mxu0 0.0
          %332 = vmatpush1.msra.mxu0 0.0
          %333 = vmatprep.subr.mxu0 0.0
          %334 = vmatpush1.msra.mxu0 0.0
          %335 = vmatprep.subr.mxu0 0.0
          %336 = vmatpush1.msra.mxu0 0.0
          %337 = vmatprep.subr.mxu0 0.0
          %338 = vmatpush1.msra.mxu0 0.0
          %339 = vmatprep.subr.mxu0 0.0
          %340 = vmatpush1.msra.mxu0 0.0
          %341 = vmatprep.subr.mxu0 0.0
          %342 = vmatpush1.msra.mxu0 0.0
          %343 = vmatprep.subr.mxu0 0.0
          %344 = vmatpush1.msra.mxu0 0.0
          %345 = vmatprep.subr.mxu0 0.0
          %346 = vmatpush1.msra.mxu0 0.0
          %347 = vmatprep.subr.mxu0 0.0
          %348 = vmatpush1.msra.mxu0 0.0
          %349 = vmatprep.subr.mxu0 0.0
          %350 = vmatpush1.msra.mxu0 0.0
          %351 = vmatprep.subr.mxu0 0.0
          %352 = vmatpush1.msra.mxu0 0.0
          %353 = vmatprep.subr.mxu0 0.0
          %354 = vmatpush1.msra.mxu0 0.0
          %355 = vmatprep.subr.mxu0 0.0
          %356 = vmatpush1.msra.mxu0 0.0
          %357 = vmatprep.subr.mxu0 0.0
          %358 = vmatpush1.msra.mxu0 0.0
          %359 = vmatprep.subr.mxu0 0.0
          %360 = vmatpush1.msra.mxu0 0.0
          %361 = vmatprep.subr.mxu0 0.0
          %362 = vmatpush1.msra.mxu0 0.0
          %363 = vmatprep.subr.mxu0 0.0
          %364 = vmatpush1.msra.mxu0 0.0
          %365 = vmatprep.subr.mxu0 0.0
          %366 = vmatpush1.msra.mxu0 0.0
          %367 = vmatprep.subr.mxu0 0.0
          %368 = vmatpush1.msra.mxu0 0.0
          %369 = vmatprep.subr.mxu0 0.0
          %370 = vmatpush1.msra.mxu0 0.0
          %371 = vmatprep.subr.mxu0 0.0
          %372 = vmatpush1.msra.mxu0 0.0
          %373 = vmatprep.subr.mxu0 0.0
          %374 = vmatpush1.msra.mxu0 0.0
          %375 = vmatprep.subr.mxu0 0.0
          %376 = vmatpush1.msra.mxu0 0.0
          %377 = vmatprep.subr.mxu0 0.0
          %378 = vmatpush1.msra.mxu0 0.0
          %379 = vmatprep.subr.mxu0 0.0
          %380 = vmatpush1.msra.mxu0 0.0
          %381 = vmatprep.subr.mxu0 0.0
          %382 = vmatpush1.msra.mxu0 0.0
          %383 = vmatprep.mubr.f32.mxu0 0.0
          %384 = vmatmul.mubr.f32.gmra.mrb[0].mxu0 %v314
          %v385 = vpop.f32.mrb[0].mxu0
          %v386 = vadd.f32 %v297, %v385
          %v387 = vpop.f32.mrb[0].mxu0
          %388 = vdwg.mxu0
          %v389 = vmax.f32 %v386, 0.0
          %v390 = vld [vmem:[%s3] sm:$0x7]
          %v391 = vld [vmem:[#allocation3] sm:$0x1]
          %v393 = vlaneseq
          %v394 = vshrl.u32 %v393, 7
          %v395 = vsub.s32 0, %v394
          %v396 = vrot.slane %v391, %v395
          %vm398 = vcmask 23552
          %v400 = vsel %vm398, %v389, 0
          %vm402 = vcmask 1042432
          %v404 = vsel %vm402, %v390, 0
          %406 = vmatprep.subr.mxu0 0.0
          %407 = vmatpush1.msra.mxu0 %v404
          %408 = vmatprep.subr.mxu0 0.0
          %409 = vmatpush1.msra.mxu0 0.0
          %410 = vmatprep.subr.mxu0 0.0
          %411 = vmatpush1.msra.mxu0 0.0
          %412 = vmatprep.subr.mxu0 0.0
          %413 = vmatpush1.msra.mxu0 0.0
          %414 = vmatprep.subr.mxu0 0.0
          %415 = vmatpush1.msra.mxu0 0.0
          %416 = vmatprep.subr.mxu0 0.0
          %417 = vmatpush1.msra.mxu0 0.0
          %418 = vmatprep.subr.mxu0 0.0
          %419 = vmatpush1.msra.mxu0 0.0
          %420 = vmatprep.subr.mxu0 0.0
          %421 = vmatpush1.msra.mxu0 0.0
          %422 = vmatprep.subr.mxu0 0.0
          %423 = vmatpush1.msra.mxu0 0.0
          %424 = vmatprep.subr.mxu0 0.0
          %425 = vmatpush1.msra.mxu0 0.0
          %426 = vmatprep.subr.mxu0 0.0
          %427 = vmatpush1.msra.mxu0 0.0
          %428 = vmatprep.subr.mxu0 0.0
          %429 = vmatpush1.msra.mxu0 0.0
          %430 = vmatprep.subr.mxu0 0.0
          %431 = vmatpush1.msra.mxu0 0.0
          %432 = vmatprep.subr.mxu0 0.0
          %433 = vmatpush1.msra.mxu0 0.0
          %434 = vmatprep.subr.mxu0 0.0
          %435 = vmatpush1.msra.mxu0 0.0
          %436 = vmatprep.subr.mxu0 0.0
          %437 = vmatpush1.msra.mxu0 0.0
          %438 = vmatprep.subr.mxu0 0.0
          %439 = vmatpush1.msra.mxu0 0.0
          %440 = vmatprep.subr.mxu0 0.0
          %441 = vmatpush1.msra.mxu0 0.0
          %442 = vmatprep.subr.mxu0 0.0
          %443 = vmatpush1.msra.mxu0 0.0
          %444 = vmatprep.subr.mxu0 0.0
          %445 = vmatpush1.msra.mxu0 0.0
          %446 = vmatprep.subr.mxu0 0.0
          %447 = vmatpush1.msra.mxu0 0.0
          %448 = vmatprep.subr.mxu0 0.0
          %449 = vmatpush1.msra.mxu0 0.0
          %450 = vmatprep.subr.mxu0 0.0
          %451 = vmatpush1.msra.mxu0 0.0
          %452 = vmatprep.subr.mxu0 0.0
          %453 = vmatpush1.msra.mxu0 0.0
          %454 = vmatprep.subr.mxu0 0.0
          %455 = vmatpush1.msra.mxu0 0.0
          %456 = vmatprep.subr.mxu0 0.0
          %457 = vmatpush1.msra.mxu0 0.0
          %458 = vmatprep.subr.mxu0 0.0
          %459 = vmatpush1.msra.mxu0 0.0
          %460 = vmatprep.subr.mxu0 0.0
          %461 = vmatpush1.msra.mxu0 0.0
          %462 = vmatprep.subr.mxu0 0.0
          %463 = vmatpush1.msra.mxu0 0.0
          %464 = vmatprep.subr.mxu0 0.0
          %465 = vmatpush1.msra.mxu0 0.0
          %466 = vmatprep.subr.mxu0 0.0
          %467 = vmatpush1.msra.mxu0 0.0
          %468 = vmatprep.subr.mxu0 0.0
          %469 = vmatpush1.msra.mxu0 0.0
          %470 = vmatprep.mubr.f32.mxu0 0.0
          %471 = vmatmul.mubr.f32.gmra.mrb[0].mxu0 %v400
          %v472 = vpop.f32.mrb[0].mxu0
          %v473 = vadd.f32 %v396, %v472
          %v474 = vpop.f32.mrb[0].mxu0
          %475 = vdwg.mxu0
          %v476 = vxor.u32 %v473, 2147483648
          %v477 = vmul.f32 %v476, 1.442695
          %v478 = vpow.pop %v477
          %v479 = vadd.f32 %v478, 1.0
          %v480 = vrcp.pop %v479
          %v481 = vmul.f32 1.0, %v480
          %vm482 = vcmask 1024
          %483 = vst.msk [vmem:[%s261] sm:$0x3] %vm482, %v481
        $region52: #{tpu_custom_call.1} parent=39 // pred_fallthru
          _
        %p484 = scmp.lt.s32.totalorder %s25, 0
        %s485 = scalar_select %p484, %s25, 0
        %s486 = smul.addr %s485, 2
        %s487 = scalar_lea.vmem %s5, %s486
        // Predicated region
        $region53: #{tpu_custom_call.1} parent=39 // pred_check
          %p488 = pneg %p163
        $region54: #{tpu_custom_call.1} parent=39 // pred_check_branch
          %490 = sbr.rel (%p488) target = $region56
        $region55: #{tpu_custom_call.1} parent=39 // pred_region
          _
        $region56: #{tpu_custom_call.1} parent=39 // pred_fallthru
          _
        // Predicated region
        $region57: #{tpu_custom_call.1} parent=39 // pred_check
          %p491 = pneg %p163
        $region58: #{tpu_custom_call.1} parent=39 // pred_check_branch
          %493 = sbr.rel (%p491) target = $region60
        $region59: #{tpu_custom_call.1} parent=39 // pred_region
          %p494 = scmp.lt.s32.totalorder %s25, 0
          %s495 = scalar_select %p494, %s25, 0
          %s496 = smul.addr %s495, 2
          %s497 = scalar_lea.vmem %s5, %s496
        $region60: #{tpu_custom_call.1} parent=39 // pred_fallthru
          _
      $region40: #{tpu_custom_call.1} parent=5 // pred_fallthru
        _
      %p498 = scmp.le.s32.totalorder 2, %s16
      // Predicated region
      $region61: #{tpu_custom_call.1} parent=5 // pred_check
        %p499 = pneg %p498
      $region62: #{tpu_custom_call.1} parent=5 // pred_check_branch
        %501 = sbr.rel (%p499) target = $region64
      $region63: #{tpu_custom_call.1} parent=5 // pred_region
        %s502 = ssub.s32 %s16, 2
      $region64: #{tpu_custom_call.1} parent=5 // pred_fallthru
        _
    $region6: #{tpu_custom_call.1} parent=1 // loop_footer
      %s20 = sadd.s32 1, %s16
    $region7: #{tpu_custom_call.1} parent=1 // loop_footer_branch
      %15 = sbr.rel target = $region3
    $region8: #{tpu_custom_call.1} parent=1 // loop_exit
      _
    %503 = vsyncpa [#allocation5], 1
    %s504 = scalar_lea.sflag [#allocation5], 1
    %505 = vsyncpa %s504, 1

</llo_original>
